<compile_context>
chip_gen: v7x
topology: tpu7x:2x2x1
jax: 0.10.0
libtpu: 0.0.40
codegen_flags: <defaults>
</compile_context>

<pallas_src>
import jax
import jax.numpy as jnp
import numpy as np
from jax.experimental import pallas as pl
from jax.experimental.pallas import tpu as pltpu

NEG_SLOPE = 0.01  # PyTorch F.leaky_relu default negative_slope


# ----------------------------------------------------------------------------
# Fused Pallas kernel: all branches for one batch element per grid step.
# ----------------------------------------------------------------------------
def _make_fused_kernel(branch_plan, block_cols, has_adj, has_tmat):
    """branch_plan: tuple of (kind, idx), kind in {"none", "adj", "time"}."""

    def kernel(*refs):
        it = iter(refs)
        x_ref = next(it)                          # [1, N, T*Cin]
        adj_ref = next(it) if has_adj else None   # [1, P, N, N]
        tm_ref = next(it) if has_tmat else None   # [1, Q, N, N]
        w_ref = next(it)                          # [T*Cin, K*T*Cout]
        b_ref = next(it)                          # [1, K*T*Cout]
        o_ref = next(it)                          # [1, N, K*T*Cout]

        x = x_ref[0]                              # [N, T*Cin]
        # One MXU matmul = feature transform of every branch.  Bias is added
        # before message passing, matching the reference ordering.
        h = jnp.dot(x, w_ref[...], preferred_element_type=jnp.float32)
        h = h + b_ref[...]                        # [N, K*T*Cout]

        for k, (kind, idx) in enumerate(branch_plan):
            hk = h[:, k * block_cols:(k + 1) * block_cols]        # [N, T*Cout]
            if kind == "adj":       # single hop with precomputed A^p
                hk = jnp.dot(adj_ref[0, idx, :, :], hk,
                             preferred_element_type=jnp.float32)
            elif kind == "time":    # single hop with time-derivative power
                hk = jnp.dot(tm_ref[0, idx, :, :], hk,
                             preferred_element_type=jnp.float32)
            hk = jnp.where(hk > 0, hk, NEG_SLOPE * hk)            # leaky_relu
            # 128-lane-aligned slice of the output block -> unmasked stores.
            o_ref[0, :, k * block_cols:(k + 1) * block_cols] = hk.astype(
                o_ref.dtype)

    return kernel


# ----------------------------------------------------------------------------
# Module wrapper: layout plumbing + operand prep, one pallas_call.
# ----------------------------------------------------------------------------
def spatiotemporal_mixhop_forward(x, adj, params):
    """x: [B, C_in, N, T], adj: [B, N, N] -> [B, Cout * n_branches, N, T]."""
    B, Cin, N, T = x.shape
    adjacency_powers = params["adjacency_powers"]
    temporal_degrees = params["temporal_degrees"]

    # ----- branch bookkeeping -------------------------------------------------
    pos_powers = sorted({p for p in adjacency_powers if p > 0})
    pos_degrees = sorted({d for d in temporal_degrees if d > 0})

    w_list, b_list, plan = [], [], []
    for p in adjacency_powers:
        w_list.append(params["weights"][p])
        b_list.append(params["biases"][p])
        plan.append(("adj", pos_powers.index(p)) if p > 0 else ("none", -1))
    for d in temporal_degrees:
        w_list.append(params["t_weights"][d])
        b_list.append(params["t_biases"][d])
        if d > 0:
            tm = params["time_matrices"][d]
            assert tm.shape[0] == N, (
                "time matrix size (output_size) must equal num_nodes")
            plan.append(("time", pos_degrees.index(d)))
        else:
            plan.append(("none", -1))

    K = len(plan)
    Cout = w_list[0].shape[1]
    block_cols = T * Cout

    # ----- operand preparation (plain XLA, once per call) ---------------------
    # x -> channel-last with time folded into lanes: [B, N, T*Cin]
    x_cl = jnp.transpose(x, (0, 2, 3, 1)).reshape(B, N, T * Cin)

    # Per-branch [Cin, Cout] weights -> T-block-diagonal, stacked along columns.
    eye_t = jnp.eye(T, dtype=x.dtype)

    def expand_w(w):                        # [Cin, Cout] -> [T*Cin, T*Cout]
        return jnp.einsum("ij,cf->icjf", eye_t, w).reshape(T * Cin, T * Cout)

    w_all = jnp.concatenate([expand_w(w) for w in w_list], axis=1)
    b_all = jnp.concatenate([jnp.tile(b, T) for b in b_list]).reshape(1, -1)

    inputs = [x_cl]
    in_specs = [pl.BlockSpec((1, N, T * Cin), lambda b_: (b_, 0, 0))]

    has_adj = len(pos_powers) > 0
    if has_adj:
        # Precompute adjacency powers once per call (B small matmuls in XLA).
        pw = {1: adj}
        for p in range(2, max(pos_powers) + 1):
            pw[p] = jnp.matmul(pw[p - 1], adj)
        adj_pows = jnp.stack([pw[p] for p in pos_powers], axis=1)  # [B,P,N,N]
        P = len(pos_powers)
        inputs.append(adj_pows)
        in_specs.append(pl.BlockSpec((1, P, N, N), lambda b_: (b_, 0, 0, 0)))

    has_tmat = len(pos_degrees) > 0
    if has_tmat:
        # Batch-independent: one copy in HBM, same block reused for every b.
        tmats = jnp.stack([params["time_matrices"][d] for d in pos_degrees],
                          axis=0)[None]                            # [1,Q,N,N]
        Q = len(pos_degrees)
        inputs.append(tmats)
        in_specs.append(pl.BlockSpec((1, Q, N, N), lambda b_: (0, 0, 0, 0)))

    inputs += [w_all, b_all]
    in_specs += [pl.BlockSpec((T * Cin, K * block_cols), lambda b_: (0, 0)),
                 pl.BlockSpec((1, K * block_cols), lambda b_: (0, 0))]

    kernel = _make_fused_kernel(tuple(plan), block_cols, has_adj, has_tmat)
    out_flat = pl.pallas_call(
        kernel,
        out_shape=jax.ShapeDtypeStruct((B, N, K * block_cols), x.dtype),
        grid=(B,),
        in_specs=in_specs,
        out_specs=pl.BlockSpec((1, N, K * block_cols), lambda b_: (b_, 0, 0)),
        compiler_params=pltpu.CompilerParams(
            dimension_semantics=("parallel",)),
    )(*inputs)

    # [B, N, K*T*Cout] -> [B, K*Cout, N, T]  (single transpose of the result)
    out = out_flat.reshape(B, N, K, T, Cout).transpose(0, 2, 4, 1, 3)
    return out.reshape(B, K * Cout, N, T)


# ----------------------------------------------------------------------------
# Deterministic parameter initialization (mirrors the module's __init__)
# ----------------------------------------------------------------------------
def xavier_uniform(key, fan_in, fan_out):
    limit = float((6.0 / (fan_in + fan_out)) ** 0.5)
    return jax.random.uniform(key, (fan_in, fan_out), jnp.float32, -limit, limit)


def get_time_derivative_matrix(size):
    return (-jnp.eye(size, dtype=jnp.float32)
            + jnp.eye(size, k=-1, dtype=jnp.float32))


def init_params(key, input_size, output_size, adjacency_powers, temporal_degrees):
    keys = jax.random.split(key, len(adjacency_powers) + len(temporal_degrees))
    weights, biases = {}, {}
    for i, p in enumerate(adjacency_powers):
        weights[p] = xavier_uniform(keys[i], input_size, output_size)
        biases[p] = jnp.zeros((output_size,), jnp.float32)
    t_weights, t_biases, time_matrices = {}, {}, {}
    for j, d in enumerate(temporal_degrees):
        t_weights[d] = xavier_uniform(keys[len(adjacency_powers) + j],
                                      input_size, output_size)
        t_biases[d] = jnp.zeros((output_size,), jnp.float32)
        if d == 0:
            time_matrices[d] = jnp.eye(output_size, dtype=jnp.float32)
        elif d == 1:
            time_matrices[d] = get_time_derivative_matrix(output_size)
        else:
            time_matrices[d] = time_matrices[d - 1] @ time_matrices[1]
    return dict(adjacency_powers=adjacency_powers, temporal_degrees=temporal_degrees,
                weights=weights, biases=biases, t_weights=t_weights,
                t_biases=t_biases, time_matrices=time_matrices)


# ----------------------------------------------------------------------------
# Pure-JAX reference (for correctness check)
# ----------------------------------------------------------------------------
def ref_forward(x, adj, params):
    B = x.shape[0]

    def branch(w, b, mat, hops):
        y = jnp.einsum("bcnt,cf->bfnt", x, w) + b[None, :, None, None]
        for _ in range(hops):
            y = jnp.einsum("bnm,bfmt->bfnt", mat, y)
        return jnp.where(y > 0, y, NEG_SLOPE * y)

    outs = []
    for p in params["adjacency_powers"]:
        outs.append(branch(params["weights"][p], params["biases"][p], adj, p))
    for d in params["temporal_degrees"]:
        if d == 0:
            outs.append(branch(params["t_weights"][d], params["t_biases"][d], adj, 0))
        else:
            tm = params["time_matrices"][d]
            mat = jnp.broadcast_to(tm[None], (B,) + tm.shape)
            outs.append(branch(params["t_weights"][d], params["t_biases"][d], mat, 1))
    return jnp.concatenate(outs, axis=1)


if __name__ == "__main__":
    key = jax.random.PRNGKey(0)
    B, Cin, N, T = 2, 4, 16, 8
    Cout = 16  # output_size; equals num_nodes so the temporal branch is shape-valid
    adjacency_powers = [0, 1, 2]
    temporal_degrees = [0, 1, 2]

    k_x, k_adj, k_param = jax.random.split(key, 3)
    x = jax.random.normal(k_x, (B, Cin, N, T), jnp.float32)
    adj_raw = jax.random.uniform(k_adj, (B, N, N), jnp.float32)
    adj = adj_raw / jnp.sum(adj_raw, axis=-1, keepdims=True)  # row-normalized

    params = init_params(k_param, Cin, Cout, adjacency_powers, temporal_degrees)

    out = spatiotemporal_mixhop_forward(x, adj, params)
    out = jax.block_until_ready(out)

    expected_channels = Cout * (len(adjacency_powers) + len(temporal_degrees))
    assert out.shape == (B, expected_channels, N, T), out.shape

    ref = ref_forward(x, adj, params)
    np.testing.assert_allclose(np.asarray(out), np.asarray(ref),
                               rtol=1e-5, atol=1e-5)

    print("KERNEL_OK")
</pallas_src>

<mosaic_0001>
module attributes {stable_mosaic.version = 11 : i64} {
  func.func @kernel(%arg0: i32, %arg1: memref<1x16x32xf32, #tpu.memory_space<vmem>>, %arg2: memref<1x2x16x16xf32, #tpu.memory_space<vmem>>, %arg3: memref<1x2x16x16xf32, #tpu.memory_space<vmem>>, %arg4: memref<32x768xf32, #tpu.memory_space<vmem>>, %arg5: memref<1x768xf32, #tpu.memory_space<vmem>>, %arg6: memref<1x16x768xf32, #tpu.memory_space<vmem>>) attributes {dimension_semantics = [#tpu.dimension_semantics<parallel>], iteration_bounds = array<i64: 2>, scalar_prefetch = 0 : i64, scratch_operands = 0 : i64, tpu.core_type = #tpu.core_type<tc>, window_params = [{transform_indices = @transform_0, window_bounds = array<i64: 1, 16, 32>}, {transform_indices = @transform_1, window_bounds = array<i64: 1, 2, 16, 16>}, {pipeline_mode = #tpu.pipeline_mode<synchronous>, transform_indices = @transform_2, window_bounds = array<i64: 1, 2, 16, 16>}, {pipeline_mode = #tpu.pipeline_mode<synchronous>, transform_indices = @transform_3, window_bounds = array<i64: 32, 768>}, {pipeline_mode = #tpu.pipeline_mode<synchronous>, transform_indices = @transform_4, window_bounds = array<i64: 1, 768>}, {transform_indices = @transform_5, window_bounds = array<i64: 1, 16, 768>}]} {
    %c0 = arith.constant 0 : index
    %c0_0 = arith.constant 0 : index
    %c0_1 = arith.constant 0 : index
    %0 = vector.load %arg1[%c0, %c0_0, %c0_1] : memref<1x16x32xf32, #tpu.memory_space<vmem>>, vector<1x16x32xf32>
    %1 = vector.shape_cast %0 : vector<1x16x32xf32> to vector<16x32xf32>
    %c0_2 = arith.constant 0 : index
    %c0_3 = arith.constant 0 : index
    %2 = vector.load %arg4[%c0_2, %c0_3] : memref<32x768xf32, #tpu.memory_space<vmem>>, vector<32x768xf32>
    %cst = arith.constant dense<0.000000e+00> : vector<16x768xf32>
    %3 = tpu.matmul %1, %2, %cst {dimension_numbers = #tpu.dot_dimension_numbers<[1], [0], [0], [1], [0, 0, 1, 1], [], []>} : vector<16x32xf32>, vector<32x768xf32>, vector<16x768xf32> -> vector<16x768xf32>
    %c0_4 = arith.constant 0 : index
    %c0_5 = arith.constant 0 : index
    %4 = vector.load %arg5[%c0_4, %c0_5] : memref<1x768xf32, #tpu.memory_space<vmem>>, vector<1x768xf32>
    %5 = vector.broadcast %4 : vector<1x768xf32> to vector<16x768xf32>
    %6 = arith.addf %3, %5 : vector<16x768xf32>
    %7 = vector.extract_strided_slice %6 {offsets = [0, 0], sizes = [16, 128], strides = [1, 1]} : vector<16x768xf32> to vector<16x128xf32>
    %cst_6 = arith.constant 0.000000e+00 : f32
    %8 = vector.broadcast %cst_6 : f32 to vector<16x128xf32>
    %9 = arith.cmpf ogt, %7, %8 : vector<16x128xf32>
    %cst_7 = arith.constant 0.00999999977 : f32
    %10 = vector.broadcast %cst_7 : f32 to vector<16x128xf32>
    %11 = arith.mulf %10, %7 : vector<16x128xf32>
    %12 = arith.select %9, %7, %11 : vector<16x128xi1>, vector<16x128xf32>
    %c0_8 = arith.constant 0 : index
    %c0_9 = arith.constant 0 : index
    %c0_10 = arith.constant 0 : index
    %13 = vector.load %arg6[%c0_8, %c0_9, %c0_10] : memref<1x16x768xf32, #tpu.memory_space<vmem>>, vector<1x16x128xf32>
    %14 = vector.shape_cast %13 : vector<1x16x128xf32> to vector<16x128xf32>
    %15 = vector.shape_cast %12 : vector<16x128xf32> to vector<1x16x128xf32>
    tpu.vector_store %arg6[%c0_8, %c0_9, %c0_10], %15 {strides = array<i32>} : memref<1x16x768xf32, #tpu.memory_space<vmem>>, vector<1x16x128xf32>,
    %16 = vector.extract_strided_slice %6 {offsets = [0, 128], sizes = [16, 128], strides = [1, 1]} : vector<16x768xf32> to vector<16x128xf32>
    %c0_11 = arith.constant 0 : index
    %c0_12 = arith.constant 0 : index
    %c0_13 = arith.constant 0 : index
    %c0_14 = arith.constant 0 : index
    %17 = vector.load %arg2[%c0_11, %c0_12, %c0_13, %c0_14] : memref<1x2x16x16xf32, #tpu.memory_space<vmem>>, vector<1x1x16x16xf32>
    %18 = vector.shape_cast %17 : vector<1x1x16x16xf32> to vector<16x16xf32>
    %cst_15 = arith.constant dense<0.000000e+00> : vector<16x128xf32>
    %19 = tpu.matmul %18, %16, %cst_15 {dimension_numbers = #tpu.dot_dimension_numbers<[1], [0], [0], [1], [0, 0, 1, 1], [], []>} : vector<16x16xf32>, vector<16x128xf32>, vector<16x128xf32> -> vector<16x128xf32>
    %cst_16 = arith.constant 0.000000e+00 : f32
    %20 = vector.broadcast %cst_16 : f32 to vector<16x128xf32>
    %21 = arith.cmpf ogt, %19, %20 : vector<16x128xf32>
    %cst_17 = arith.constant 0.00999999977 : f32
    %22 = vector.broadcast %cst_17 : f32 to vector<16x128xf32>
    %23 = arith.mulf %22, %19 : vector<16x128xf32>
    %24 = arith.select %21, %19, %23 : vector<16x128xi1>, vector<16x128xf32>
    %c0_18 = arith.constant 0 : index
    %c0_19 = arith.constant 0 : index
    %c128 = arith.constant 128 : index
    %25 = vector.load %arg6[%c0_18, %c0_19, %c128] : memref<1x16x768xf32, #tpu.memory_space<vmem>>, vector<1x16x128xf32>
    %26 = vector.shape_cast %25 : vector<1x16x128xf32> to vector<16x128xf32>
    %27 = vector.shape_cast %24 : vector<16x128xf32> to vector<1x16x128xf32>
    tpu.vector_store %arg6[%c0_18, %c0_19, %c128], %27 {strides = array<i32>} : memref<1x16x768xf32, #tpu.memory_space<vmem>>, vector<1x16x128xf32>,
    %28 = vector.extract_strided_slice %6 {offsets = [0, 256], sizes = [16, 128], strides = [1, 1]} : vector<16x768xf32> to vector<16x128xf32>
    %c0_20 = arith.constant 0 : index
    %c1 = arith.constant 1 : index
    %c0_21 = arith.constant 0 : index
    %c0_22 = arith.constant 0 : index
    %29 = vector.load %arg2[%c0_20, %c1, %c0_21, %c0_22] : memref<1x2x16x16xf32, #tpu.memory_space<vmem>>, vector<1x1x16x16xf32>
    %30 = vector.shape_cast %29 : vector<1x1x16x16xf32> to vector<16x16xf32>
    %cst_23 = arith.constant dense<0.000000e+00> : vector<16x128xf32>
    %31 = tpu.matmul %30, %28, %cst_23 {dimension_numbers = #tpu.dot_dimension_numbers<[1], [0], [0], [1], [0, 0, 1, 1], [], []>} : vector<16x16xf32>, vector<16x128xf32>, vector<16x128xf32> -> vector<16x128xf32>
    %cst_24 = arith.constant 0.000000e+00 : f32
    %32 = vector.broadcast %cst_24 : f32 to vector<16x128xf32>
    %33 = arith.cmpf ogt, %31, %32 : vector<16x128xf32>
    %cst_25 = arith.constant 0.00999999977 : f32
    %34 = vector.broadcast %cst_25 : f32 to vector<16x128xf32>
    %35 = arith.mulf %34, %31 : vector<16x128xf32>
    %36 = arith.select %33, %31, %35 : vector<16x128xi1>, vector<16x128xf32>
    %c0_26 = arith.constant 0 : index
    %c0_27 = arith.constant 0 : index
    %c256 = arith.constant 256 : index
    %37 = vector.load %arg6[%c0_26, %c0_27, %c256] : memref<1x16x768xf32, #tpu.memory_space<vmem>>, vector<1x16x128xf32>
    %38 = vector.shape_cast %37 : vector<1x16x128xf32> to vector<16x128xf32>
    %39 = vector.shape_cast %36 : vector<16x128xf32> to vector<1x16x128xf32>
    tpu.vector_store %arg6[%c0_26, %c0_27, %c256], %39 {strides = array<i32>} : memref<1x16x768xf32, #tpu.memory_space<vmem>>, vector<1x16x128xf32>,
    %40 = vector.extract_strided_slice %6 {offsets = [0, 384], sizes = [16, 128], strides = [1, 1]} : vector<16x768xf32> to vector<16x128xf32>
    %cst_28 = arith.constant 0.000000e+00 : f32
    %41 = vector.broadcast %cst_28 : f32 to vector<16x128xf32>
    %42 = arith.cmpf ogt, %40, %41 : vector<16x128xf32>
    %cst_29 = arith.constant 0.00999999977 : f32
    %43 = vector.broadcast %cst_29 : f32 to vector<16x128xf32>
    %44 = arith.mulf %43, %40 : vector<16x128xf32>
    %45 = arith.select %42, %40, %44 : vector<16x128xi1>, vector<16x128xf32>
    %c0_30 = arith.constant 0 : index
    %c0_31 = arith.constant 0 : index
    %c384 = arith.constant 384 : index
    %46 = vector.load %arg6[%c0_30, %c0_31, %c384] : memref<1x16x768xf32, #tpu.memory_space<vmem>>, vector<1x16x128xf32>
    %47 = vector.shape_cast %46 : vector<1x16x128xf32> to vector<16x128xf32>
    %48 = vector.shape_cast %45 : vector<16x128xf32> to vector<1x16x128xf32>
    tpu.vector_store %arg6[%c0_30, %c0_31, %c384], %48 {strides = array<i32>} : memref<1x16x768xf32, #tpu.memory_space<vmem>>, vector<1x16x128xf32>,
    %49 = vector.extract_strided_slice %6 {offsets = [0, 512], sizes = [16, 128], strides = [1, 1]} : vector<16x768xf32> to vector<16x128xf32>
    %c0_32 = arith.constant 0 : index
    %c0_33 = arith.constant 0 : index
    %c0_34 = arith.constant 0 : index
    %c0_35 = arith.constant 0 : index
    %50 = vector.load %arg3[%c0_32, %c0_33, %c0_34, %c0_35] : memref<1x2x16x16xf32, #tpu.memory_space<vmem>>, vector<1x1x16x16xf32>
    %51 = vector.shape_cast %50 : vector<1x1x16x16xf32> to vector<16x16xf32>
    %cst_36 = arith.constant dense<0.000000e+00> : vector<16x128xf32>
    %52 = tpu.matmul %51, %49, %cst_36 {dimension_numbers = #tpu.dot_dimension_numbers<[1], [0], [0], [1], [0, 0, 1, 1], [], []>} : vector<16x16xf32>, vector<16x128xf32>, vector<16x128xf32> -> vector<16x128xf32>
    %cst_37 = arith.constant 0.000000e+00 : f32
    %53 = vector.broadcast %cst_37 : f32 to vector<16x128xf32>
    %54 = arith.cmpf ogt, %52, %53 : vector<16x128xf32>
    %cst_38 = arith.constant 0.00999999977 : f32
    %55 = vector.broadcast %cst_38 : f32 to vector<16x128xf32>
    %56 = arith.mulf %55, %52 : vector<16x128xf32>
    %57 = arith.select %54, %52, %56 : vector<16x128xi1>, vector<16x128xf32>
    %c0_39 = arith.constant 0 : index
    %c0_40 = arith.constant 0 : index
    %c512 = arith.constant 512 : index
    %58 = vector.load %arg6[%c0_39, %c0_40, %c512] : memref<1x16x768xf32, #tpu.memory_space<vmem>>, vector<1x16x128xf32>
    %59 = vector.shape_cast %58 : vector<1x16x128xf32> to vector<16x128xf32>
    %60 = vector.shape_cast %57 : vector<16x128xf32> to vector<1x16x128xf32>
    tpu.vector_store %arg6[%c0_39, %c0_40, %c512], %60 {strides = array<i32>} : memref<1x16x768xf32, #tpu.memory_space<vmem>>, vector<1x16x128xf32>,
    %61 = vector.extract_strided_slice %6 {offsets = [0, 640], sizes = [16, 128], strides = [1, 1]} : vector<16x768xf32> to vector<16x128xf32>
    %c0_41 = arith.constant 0 : index
    %c1_42 = arith.constant 1 : index
    %c0_43 = arith.constant 0 : index
    %c0_44 = arith.constant 0 : index
    %62 = vector.load %arg3[%c0_41, %c1_42, %c0_43, %c0_44] : memref<1x2x16x16xf32, #tpu.memory_space<vmem>>, vector<1x1x16x16xf32>
    %63 = vector.shape_cast %62 : vector<1x1x16x16xf32> to vector<16x16xf32>
    %cst_45 = arith.constant dense<0.000000e+00> : vector<16x128xf32>
    %64 = tpu.matmul %63, %61, %cst_45 {dimension_numbers = #tpu.dot_dimension_numbers<[1], [0], [0], [1], [0, 0, 1, 1], [], []>} : vector<16x16xf32>, vector<16x128xf32>, vector<16x128xf32> -> vector<16x128xf32>
    %cst_46 = arith.constant 0.000000e+00 : f32
    %65 = vector.broadcast %cst_46 : f32 to vector<16x128xf32>
    %66 = arith.cmpf ogt, %64, %65 : vector<16x128xf32>
    %cst_47 = arith.constant 0.00999999977 : f32
    %67 = vector.broadcast %cst_47 : f32 to vector<16x128xf32>
    %68 = arith.mulf %67, %64 : vector<16x128xf32>
    %69 = arith.select %66, %64, %68 : vector<16x128xi1>, vector<16x128xf32>
    %c0_48 = arith.constant 0 : index
    %c0_49 = arith.constant 0 : index
    %c640 = arith.constant 640 : index
    %70 = vector.load %arg6[%c0_48, %c0_49, %c640] : memref<1x16x768xf32, #tpu.memory_space<vmem>>, vector<1x16x128xf32>
    %71 = vector.shape_cast %70 : vector<1x16x128xf32> to vector<16x128xf32>
    %72 = vector.shape_cast %69 : vector<16x128xf32> to vector<1x16x128xf32>
    tpu.vector_store %arg6[%c0_48, %c0_49, %c640], %72 {strides = array<i32>} : memref<1x16x768xf32, #tpu.memory_space<vmem>>, vector<1x16x128xf32>,
    return
  }
  func.func @transform_0(%arg0: i32) -> (i32, i32, i32) {
    %c0_i32 = arith.constant 0 : i32
    %c0_i32_0 = arith.constant 0 : i32
    %c0_i32_1 = arith.constant 0 : i32
    return %arg0, %c0_i32, %c0_i32_0 : i32, i32, i32
  }
  func.func @transform_1(%arg0: i32) -> (i32, i32, i32, i32) {
    %c0_i32 = arith.constant 0 : i32
    %c0_i32_0 = arith.constant 0 : i32
    %c0_i32_1 = arith.constant 0 : i32
    %c0_i32_2 = arith.constant 0 : i32
    return %arg0, %c0_i32, %c0_i32_0, %c0_i32_1 : i32, i32, i32, i32
  }
  func.func @transform_2(%arg0: i32) -> (i32, i32, i32, i32) {
    %c0_i32 = arith.constant 0 : i32
    %c0_i32_0 = arith.constant 0 : i32
    %c0_i32_1 = arith.constant 0 : i32
    %c0_i32_2 = arith.constant 0 : i32
    %c0_i32_3 = arith.constant 0 : i32
    return %c0_i32, %c0_i32_0, %c0_i32_1, %c0_i32_2 : i32, i32, i32, i32
  }
  func.func @transform_3(%arg0: i32) -> (i32, i32) {
    %c0_i32 = arith.constant 0 : i32
    %c0_i32_0 = arith.constant 0 : i32
    %c0_i32_1 = arith.constant 0 : i32
    return %c0_i32, %c0_i32_0 : i32, i32
  }
  func.func @transform_4(%arg0: i32) -> (i32, i32) {
    %c0_i32 = arith.constant 0 : i32
    %c0_i32_0 = arith.constant 0 : i32
    %c0_i32_1 = arith.constant 0 : i32
    return %c0_i32, %c0_i32_0 : i32, i32
  }
  func.func @transform_5(%arg0: i32) -> (i32, i32, i32) {
    %c0_i32 = arith.constant 0 : i32
    %c0_i32_0 = arith.constant 0 : i32
    %c0_i32_1 = arith.constant 0 : i32
    return %arg0, %c0_i32, %c0_i32_0 : i32, i32, i32
  }
}

</mosaic_0001>

<llo_original>
// kernel: tpu_custom_call.1
$region0: #{tpu_custom_call.1}
  #allocation0 [shape = 'u32[]', space=smem, size = 0x4, offset = 0x4, fixed_abs, tag = 'smem constant byte address 0x4 - core index']
  #allocation1 [shape = 'u32[144,128]{1,0:T(1,128)}', space=vmem, size = 0x12000, scoped, tag = 'internal scratch']
  %s0 = inlined_call_operand.hbm [shape: f32[2,16,32], index: 0, kind: input, shape index: {}]
  %s1 = inlined_call_operand.hbm [shape: f32[2,2,16,16], index: 1, kind: input, shape index: {}]
  %s2 = inlined_call_operand.hbm [shape: f32[1,2,16,16], index: 2, kind: input, shape index: {}]
  %s3 = inlined_call_operand.hbm [shape: f32[32,768], index: 3, kind: input, shape index: {}]
  %s4 = inlined_call_operand.vmem [shape: f32[1,768], index: 4, kind: input, shape index: {}]
  %s5 = inlined_call_operand.hbm [shape: f32[2,16,768], index: 5, kind: output, shape index: {}]
  %s6 = sld [smem:[#allocation0]]
  $region69: #{tpu_custom_call.1} parent=0
    _
  %s8 = ssub.s32 1, %s6
  %s9 = scalar_select 0, %s8, %s6
  $region1: #{tpu_custom_call.1} parent=0
    #allocation2 [shape = 'u8[16384]{0}', space=vmem, size = 0x4000, scoped, tag = 'input window, operand 0']
    #allocation3 [shape = 's32[2]{0}', space=sflag, size = 0x8, scoped, tag = 'scoped memory for tpu_custom_call.1']
    #allocation4 [shape = 's32[2]{0}', space=sflag, size = 0x8, scoped, tag = 'scoped memory for tpu_custom_call.1']
    #allocation5 [shape = 'u8[32768]{0}', space=vmem, size = 0x8000, scoped, tag = 'input window, operand 1']
    #allocation6 [shape = 's32[2]{0}', space=sflag, size = 0x8, scoped, tag = 'scoped memory for tpu_custom_call.1']
    #allocation7 [shape = 'u8[16384]{0}', space=vmem, size = 0x4000, scoped, tag = 'input window, operand 2, single buffered']
    #allocation8 [shape = 'u8[98304]{0}', space=vmem, size = 0x18000, scoped, tag = 'input window, operand 3, single buffered']
    #allocation9 [shape = 's32[1]{0}', space=sflag, size = 0x4, scoped, tag = 'scoped memory for tpu_custom_call.1']
    #allocation10 [shape = 'u8[98304]{0}', space=vmem, size = 0x18000, scoped, tag = 'output window, operand 0']
    %10 = vsyncpa [#allocation3], 0
    %s11 = scalar_lea.sflag [#allocation3], 1
    %12 = vsyncpa %s11, 0
    %13 = vsyncpa [#allocation6], 0
    %s14 = scalar_lea.sflag [#allocation6], 1
    %15 = vsyncpa %s14, 0
    %16 = vsyncpa [#allocation9], 0
    %17 = vsyncpa [#allocation4], 0
    %s18 = scalar_lea.sflag [#allocation4], 1
    %19 = vsyncpa %s18, 0
    loop: start=0, step=1, limit=4
    $region2: #{tpu_custom_call.1} parent=1 // loop_pre_header
      _
    $region3: #{tpu_custom_call.1} parent=1 // loop_header
      %s21 = sphi 0, %s25
      %p22 = scmp.ge.s32.totalorder %s21, 4
      %s31 = sphi 0, %s33
      %s34 = sphi 0, %s31
      %s35 = sphi 0, %s34
      %s51 = sphi 0, %s35
      %s57 = sphi 0, %s59
      %s60 = sphi 0, %s57
      %s61 = sphi 0, %s60
      %s77 = sphi 0, %s61
      %s81 = sphi 0, %s81
      %s83 = sphi 0, %s81
      %s84 = sphi 0, %s83
      %s98 = sphi 0, %s84
      %s102 = sphi 0, %s102
      %s104 = sphi 0, %s102
      %s105 = sphi 0, %s104
      %s119 = sphi 0, %s105
      %s123 = sphi 0, %s123
      %s125 = sphi 0, %s123
      %s126 = sphi 0, %s125
      %s140 = sphi 0, %s126
      %s146 = sphi 0, %s148
      %s149 = sphi 0, %s146
      %s150 = sphi 0, %s149
      %s166 = sphi 0, %s150
    $region4: #{tpu_custom_call.1} parent=1 // loop_header_branch
      %24 = sbr.rel (%p22) target = $region8
    $region5: #{tpu_custom_call.1} parent=1 // loop_body
      %s26 = ssub.s32 %s21, 1
      %s27 = ssub.s32 %s21, 2
      %s28 = sadd.s32 %s21, 1
      %s29 = ssub.s32 %s21, %s28
      %p30 = scmp.eq.s32.totalorder %s29, 0
      %s32 = sadd.s32 %s31, 1
      %s33 = scalar_select %p30, %s31, %s32
      %p36 = pneg %p30
      %p37 = scmp.eq.s32.totalorder %s21, 1
      %p38 = por %p36, %p37
      %p39 = scmp.ne.s32.totalorder %s31, %s34
      %p40 = scmp.eq.s32.totalorder %s21, 0
      %p41 = por %p39, %p40
      %p42 = scmp.ne.s32.totalorder %s31, %s34
      %p43 = scmp.eq.s32.totalorder %s26, 1
      %p44 = por %p42, %p43
      %p45 = scmp.ne.s32.totalorder %s34, %s35
      %p46 = scmp.eq.s32.totalorder %s26, 0
      %p47 = por %p45, %p46
      %p48 = scmp.ne.s32.totalorder %s34, %s35
      %p49 = scmp.eq.s32.totalorder %s27, 1
      %p50 = por %p48, %p49
      %p52 = scmp.ne.s32.totalorder %s35, %s51
      %p53 = scmp.eq.s32.totalorder %s27, 0
      %p54 = por %p52, %p53
      %s55 = ssub.s32 %s21, %s28
      %p56 = scmp.eq.s32.totalorder %s55, 0
      %s58 = sadd.s32 %s57, 1
      %s59 = scalar_select %p56, %s57, %s58
      %p62 = pneg %p56
      %p63 = scmp.eq.s32.totalorder %s21, 1
      %p64 = por %p62, %p63
      %p65 = scmp.ne.s32.totalorder %s57, %s60
      %p66 = scmp.eq.s32.totalorder %s21, 0
      %p67 = por %p65, %p66
      %p68 = scmp.ne.s32.totalorder %s57, %s60
      %p69 = scmp.eq.s32.totalorder %s26, 1
      %p70 = por %p68, %p69
      %p71 = scmp.ne.s32.totalorder %s60, %s61
      %p72 = scmp.eq.s32.totalorder %s26, 0
      %p73 = por %p71, %p72
      %p74 = scmp.ne.s32.totalorder %s60, %s61
      %p75 = scmp.eq.s32.totalorder %s27, 1
      %p76 = por %p74, %p75
      %p78 = scmp.ne.s32.totalorder %s61, %s77
      %p79 = scmp.eq.s32.totalorder %s27, 0
      %p80 = por %p78, %p79
      %s82 = sadd.s32 %s81, 1
      %p85 = scmp.eq.s32.totalorder %s21, 1
      %p86 = scmp.ne.s32.totalorder %s81, %s83
      %p87 = scmp.eq.s32.totalorder %s21, 0
      %p88 = por %p86, %p87
      %p89 = scmp.ne.s32.totalorder %s81, %s83
      %p90 = scmp.eq.s32.totalorder %s26, 1
      %p91 = por %p89, %p90
      %p92 = scmp.ne.s32.totalorder %s83, %s84
      %p93 = scmp.eq.s32.totalorder %s26, 0
      %p94 = por %p92, %p93
      %p95 = scmp.ne.s32.totalorder %s83, %s84
      %p96 = scmp.eq.s32.totalorder %s27, 1
      %p97 = por %p95, %p96
      %p99 = scmp.ne.s32.totalorder %s84, %s98
      %p100 = scmp.eq.s32.totalorder %s27, 0
      %p101 = por %p99, %p100
      %s103 = sadd.s32 %s102, 1
      %p106 = scmp.eq.s32.totalorder %s21, 1
      %p107 = scmp.ne.s32.totalorder %s102, %s104
      %p108 = scmp.eq.s32.totalorder %s21, 0
      %p109 = por %p107, %p108
      %p110 = scmp.ne.s32.totalorder %s102, %s104
      %p111 = scmp.eq.s32.totalorder %s26, 1
      %p112 = por %p110, %p111
      %p113 = scmp.ne.s32.totalorder %s104, %s105
      %p114 = scmp.eq.s32.totalorder %s26, 0
      %p115 = por %p113, %p114
      %p116 = scmp.ne.s32.totalorder %s104, %s105
      %p117 = scmp.eq.s32.totalorder %s27, 1
      %p118 = por %p116, %p117
      %p120 = scmp.ne.s32.totalorder %s105, %s119
      %p121 = scmp.eq.s32.totalorder %s27, 0
      %p122 = por %p120, %p121
      %s124 = sadd.s32 %s123, 1
      %p127 = scmp.eq.s32.totalorder %s21, 1
      %p128 = scmp.ne.s32.totalorder %s123, %s125
      %p129 = scmp.eq.s32.totalorder %s21, 0
      %p130 = por %p128, %p129
      %p131 = scmp.ne.s32.totalorder %s123, %s125
      %p132 = scmp.eq.s32.totalorder %s26, 1
      %p133 = por %p131, %p132
      %p134 = scmp.ne.s32.totalorder %s125, %s126
      %p135 = scmp.eq.s32.totalorder %s26, 0
      %p136 = por %p134, %p135
      %p137 = scmp.ne.s32.totalorder %s125, %s126
      %p138 = scmp.eq.s32.totalorder %s27, 1
      %p139 = por %p137, %p138
      %p141 = scmp.ne.s32.totalorder %s126, %s140
      %p142 = scmp.eq.s32.totalorder %s27, 0
      %p143 = por %p141, %p142
      %s144 = ssub.s32 %s21, %s28
      %p145 = scmp.eq.s32.totalorder %s144, 0
      %s147 = sadd.s32 %s146, 1
      %s148 = scalar_select %p145, %s146, %s147
      %p151 = pneg %p145
      %p152 = scmp.eq.s32.totalorder %s21, 1
      %p153 = por %p151, %p152
      %p154 = scmp.ne.s32.totalorder %s146, %s149
      %p155 = scmp.eq.s32.totalorder %s21, 0
      %p156 = por %p154, %p155
      %p157 = scmp.ne.s32.totalorder %s146, %s149
      %p158 = scmp.eq.s32.totalorder %s26, 1
      %p159 = por %p157, %p158
      %p160 = scmp.ne.s32.totalorder %s149, %s150
      %p161 = scmp.eq.s32.totalorder %s26, 0
      %p162 = por %p160, %p161
      %p163 = scmp.ne.s32.totalorder %s149, %s150
      %p164 = scmp.eq.s32.totalorder %s27, 1
      %p165 = por %p163, %p164
      %p167 = scmp.ne.s32.totalorder %s150, %s166
      %p168 = scmp.eq.s32.totalorder %s27, 0
      %p169 = por %p167, %p168
      %p170 = scmp.le.s32.totalorder 1, %s21
      %p171 = scmp.lt.s32.totalorder %s21, 3
      %p172 = pnand %p170, %p171
      %p173 = pneg %p172
      // Predicated region
      $region9: #{tpu_custom_call.1} parent=5 // pred_check
        _
      $region10: #{tpu_custom_call.1} parent=5 // pred_check_branch
        %175 = sbr.rel (%p172) target = $region12
      $region11: #{tpu_custom_call.1} parent=5 // pred_region
        %s176 = ssub.s32 %s21, 1
        // Predicated region
        $region13: #{tpu_custom_call.1} parent=11 // pred_check
          %p177 = pneg %p94
        $region14: #{tpu_custom_call.1} parent=11 // pred_check_branch
          %179 = sbr.rel (%p177) target = $region16
        $region15: #{tpu_custom_call.1} parent=11 // pred_region
          %s181 = ssub.s32 512, 512
          %182 = vsyncadd [#allocation6], %s181
          %s183 = sshll.u32 [#allocation7], 4
          %s184 = int_to_ptr.vmem [resolvable:$true] %s183
          %189 = dma.hbm_to_vmem [thread:$0]  %s2, 512, %s184, [#allocation6], 128, 128, 8
        $region16: #{tpu_custom_call.1} parent=11 // pred_fallthru
          _
        // Predicated region
        $region17: #{tpu_custom_call.1} parent=11 // pred_check
          %p190 = pneg %p115
        $region18: #{tpu_custom_call.1} parent=11 // pred_check_branch
          %192 = sbr.rel (%p190) target = $region20
        $region19: #{tpu_custom_call.1} parent=11 // pred_region
          %s194 = ssub.s32 3072, 3072
          %195 = vsyncadd [#allocation9], %s194
          %s196 = sshll.u32 [#allocation8], 4
          %s197 = int_to_ptr.vmem [resolvable:$true] %s196
          %202 = dma.hbm_to_vmem [thread:$0]  %s3, 3072, %s197, [#allocation9], 768, 768, 48
        $region20: #{tpu_custom_call.1} parent=11 // pred_fallthru
          _
        // Predicated region
        $region21: #{tpu_custom_call.1} parent=11 // pred_check
          %p203 = pneg %p136
        $region22: #{tpu_custom_call.1} parent=11 // pred_check_branch
          %205 = sbr.rel (%p203) target = $region24
        $region23: #{tpu_custom_call.1} parent=11 // pred_region
          _
        $region24: #{tpu_custom_call.1} parent=11 // pred_fallthru
          _
      $region12: #{tpu_custom_call.1} parent=5 // pred_fallthru
        _
      %p206 = scmp.lt.s32.totalorder %s21, 2
      // Predicated region
      $region25: #{tpu_custom_call.1} parent=5 // pred_check
        %p207 = pneg %p206
      $region26: #{tpu_custom_call.1} parent=5 // pred_check_branch
        %209 = sbr.rel (%p207) target = $region28
      $region27: #{tpu_custom_call.1} parent=5 // pred_region
        // Predicated region
        $region29: #{tpu_custom_call.1} parent=27 // pred_check
          %p210 = pneg %p41
        $region30: #{tpu_custom_call.1} parent=27 // pred_check_branch
          %212 = sbr.rel (%p210) target = $region32
        $region31: #{tpu_custom_call.1} parent=27 // pred_region
          %s213 = sand.u32 %s31, 1
          %s214 = scalar_lea.sflag [#allocation3], %s213
          %s215 = sand.u32 %s31, 1
          %s216 = smul.addr %s215, 16
          %s217 = scalar_lea.vmem [#allocation2], %s216
          %s219 = ssub.s32 256, 256
          %220 = vsyncadd %s214, %s219
          %s221 = smul.addr %s21, 2
          %s222 = smul.addr %s221, 128
          %s223 = scalar_lea.hbm %s0, %s222
          %s224 = sshll.u32 %s217, 4
          %s225 = int_to_ptr.vmem [resolvable:$true] %s224
          %230 = dma.hbm_to_vmem [thread:$0]  %s223, 256, %s225, %s214, 128, 128, 8
        $region32: #{tpu_custom_call.1} parent=27 // pred_fallthru
          _
        // Predicated region
        $region33: #{tpu_custom_call.1} parent=27 // pred_check
          %p231 = pneg %p67
        $region34: #{tpu_custom_call.1} parent=27 // pred_check_branch
          %233 = sbr.rel (%p231) target = $region36
        $region35: #{tpu_custom_call.1} parent=27 // pred_region
          %s234 = sand.u32 %s21, 1
          %s235 = scalar_lea.sflag [#allocation6], %s234
          %s236 = sand.u32 %s57, 1
          %s237 = smul.addr %s236, 32
          %s238 = scalar_lea.vmem [#allocation5], %s237
          %s240 = ssub.s32 512, 512
          %241 = vsyncadd %s235, %s240
          %s242 = smul.addr %s21, 4
          %s243 = smul.addr %s242, 128
          %s244 = scalar_lea.hbm %s1, %s243
          %s245 = sshll.u32 %s238, 4
          %s246 = int_to_ptr.vmem [resolvable:$true] %s245
          %251 = dma.hbm_to_vmem [thread:$0]  %s244, 512, %s246, %s235, 128, 128, 8
        $region36: #{tpu_custom_call.1} parent=27 // pred_fallthru
          _
      $region28: #{tpu_custom_call.1} parent=5 // pred_fallthru
        _
      %p252 = scmp.le.s32.totalorder 1, %s21
      %p253 = scmp.lt.s32.totalorder %s21, 3
      %p254 = pnand %p252, %p253
      %p255 = pneg %p254
      // Predicated region
      $region37: #{tpu_custom_call.1} parent=5 // pred_check
        _
      $region38: #{tpu_custom_call.1} parent=5 // pred_check_branch
        %257 = sbr.rel (%p254) target = $region40
      $region39: #{tpu_custom_call.1} parent=5 // pred_region
        %s258 = ssub.s32 %s21, 1
        %s259 = sand.u32 %s34, 1
        %s260 = scalar_lea.sflag [#allocation3], %s259
        %s261 = sand.u32 %s34, 1
        %s262 = smul.addr %s261, 16
        %s263 = scalar_lea.vmem [#allocation2], %s262
        // Predicated region
        $region41: #{tpu_custom_call.1} parent=39 // pred_check
          %p264 = pneg %p47
        $region42: #{tpu_custom_call.1} parent=39 // pred_check_branch
          %266 = sbr.rel (%p264) target = $region44
        $region43: #{tpu_custom_call.1} parent=39 // pred_region
          %267 = dma.done %s260, 256
        $region44: #{tpu_custom_call.1} parent=39 // pred_fallthru
          _
        %s268 = sand.u32 %s26, 1
        %s269 = scalar_lea.sflag [#allocation6], %s268
        %s270 = sand.u32 %s60, 1
        %s271 = smul.addr %s270, 32
        %s272 = scalar_lea.vmem [#allocation5], %s271
        // Predicated region
        $region45: #{tpu_custom_call.1} parent=39 // pred_check
          %p273 = pneg %p73
        $region46: #{tpu_custom_call.1} parent=39 // pred_check_branch
          %275 = sbr.rel (%p273) target = $region48
        $region47: #{tpu_custom_call.1} parent=39 // pred_region
          %276 = dma.done %s269, 512
        $region48: #{tpu_custom_call.1} parent=39 // pred_fallthru
          _
        // Predicated region
        $region49: #{tpu_custom_call.1} parent=39 // pred_check
          %p277 = pneg %p94
        $region50: #{tpu_custom_call.1} parent=39 // pred_check_branch
          %279 = sbr.rel (%p277) target = $region52
        $region51: #{tpu_custom_call.1} parent=39 // pred_region
          %280 = dma.done [#allocation6], 512
        $region52: #{tpu_custom_call.1} parent=39 // pred_fallthru
          _
        // Predicated region
        $region53: #{tpu_custom_call.1} parent=39 // pred_check
          %p281 = pneg %p115
        $region54: #{tpu_custom_call.1} parent=39 // pred_check_branch
          %283 = sbr.rel (%p281) target = $region56
        $region55: #{tpu_custom_call.1} parent=39 // pred_region
          %284 = dma.done [#allocation9], 3072
        $region56: #{tpu_custom_call.1} parent=39 // pred_fallthru
          _
        %s285 = sand.u32 %s34, 1
        %s286 = scalar_lea.sflag [#allocation3], %s285
        %s287 = sand.u32 %s34, 1
        %s288 = smul.addr %s287, 16
        %s289 = scalar_lea.vmem [#allocation2], %s288
        %p290 = pneg %p47
        %p291 = pneg %p44
        %s292 = sand.u32 %s26, 1
        %s293 = scalar_lea.sflag [#allocation6], %s292
        %s294 = sand.u32 %s60, 1
        %s295 = smul.addr %s294, 32
        %s296 = scalar_lea.vmem [#allocation5], %s295
        %p297 = pneg %p73
        %p298 = pneg %p70
        %p299 = pneg %p94
        %p300 = pneg %p91
        %p301 = pneg %p115
        %p302 = pneg %p112
        %p303 = pneg %p136
        %p304 = pneg %p133
        %p305 = pneg %p162
        %p306 = pneg %p159
        %s307 = sand.u32 %s149, 1
        %s308 = scalar_lea.sflag [#allocation4], %s307
        %s309 = sand.u32 %s149, 1
        %s310 = smul.addr %s309, 96
        %s311 = scalar_lea.vmem [#allocation10], %s310
        %v312 = vld [vmem:[%s263] sm:$0xff]
        %v313 = vld [vmem:[%s263 + $0x8] sm:$0xff]
        %v314 = vld [vmem:[#allocation8] sm:$0xff]
        %v315 = vld [vmem:[#allocation8 + $0x8] sm:$0xff]
        %v316 = vld [vmem:[#allocation8 + $0x10] sm:$0xff]
        %v317 = vld [vmem:[#allocation8 + $0x18] sm:$0xff]
        %v318 = vld [vmem:[#allocation8 + $0x20] sm:$0xff]
        %v319 = vld [vmem:[#allocation8 + $0x28] sm:$0xff]
        %v320 = vld [vmem:[#allocation8 + $0x30] sm:$0xff]
        %v321 = vld [vmem:[#allocation8 + $0x38] sm:$0xff]
        %v322 = vld [vmem:[#allocation8 + $0x40] sm:$0xff]
        %v323 = vld [vmem:[#allocation8 + $0x48] sm:$0xff]
        %v324 = vld [vmem:[#allocation8 + $0x50] sm:$0xff]
        %v325 = vld [vmem:[#allocation8 + $0x58] sm:$0xff]
        %v326 = vld [vmem:[#allocation8 + $0x60] sm:$0xff]
        %v327 = vld [vmem:[#allocation8 + $0x68] sm:$0xff]
        %v328 = vld [vmem:[#allocation8 + $0x70] sm:$0xff]
        %v329 = vld [vmem:[#allocation8 + $0x78] sm:$0xff]
        %v330 = vld [vmem:[#allocation8 + $0x80] sm:$0xff]
        %v331 = vld [vmem:[#allocation8 + $0x88] sm:$0xff]
        %v332 = vld [vmem:[#allocation8 + $0x90] sm:$0xff]
        %v333 = vld [vmem:[#allocation8 + $0x98] sm:$0xff]
        %v334 = vld [vmem:[#allocation8 + $0xa0] sm:$0xff]
        %v335 = vld [vmem:[#allocation8 + $0xa8] sm:$0xff]
        %v336 = vld [vmem:[#allocation8 + $0xb0] sm:$0xff]
        %v337 = vld [vmem:[#allocation8 + $0xb8] sm:$0xff]
        %v338 = vld [vmem:[%s4] sm:$0x3f]
        %v340 = vlaneseq
        %v341 = vshrl.u32 %v340, 7
        %v342 = vsub.s32 0, %v341
        %v343 = vrot.slane %v338, %v342
        %v344 = vlaneseq
        %v345 = vshrl.u32 %v344, 7
        %v346 = vsub.s32 1, %v345
        %v347 = vrot.slane %v338, %v346
        %v348 = vlaneseq
        %v349 = vshrl.u32 %v348, 7
        %v350 = vsub.s32 2, %v349
        %v351 = vrot.slane %v338, %v350
        %v352 = vlaneseq
        %v353 = vshrl.u32 %v352, 7
        %v354 = vsub.s32 3, %v353
        %v355 = vrot.slane %v338, %v354
        %v356 = vlaneseq
        %v357 = vshrl.u32 %v356, 7
        %v358 = vsub.s32 4, %v357
        %v359 = vrot.slane %v338, %v358
        %v360 = vlaneseq
        %v361 = vshrl.u32 %v360, 7
        %v362 = vsub.s32 5, %v361
        %v363 = vrot.slane %v338, %v362
        %vm370 = vcmask 261120
        %v372 = vsel %vm370, %v312, 0
        %v375 = vsel %vm370, %v313, 0
        %377 = vmatprep.subr.mxu0 %v315
        %378 = vmatpush1.msra.mxu0 %v314
        %379 = vmatprep.subr.mxu0 %v321
        %380 = vmatpush1.msra.mxu0 %v320
        %381 = vmatprep.subr.mxu0 %v327
        %382 = vmatpush1.msra.mxu0 %v326
        %383 = vmatprep.subr.mxu0 %v333
        %384 = vmatpush1.msra.mxu0 %v332
        %385 = vmatprep.subr.mxu0 0.0
        %386 = vmatpush1.msra.mxu0 0.0
        %387 = vmatprep.subr.mxu0 0.0
        %388 = vmatpush1.msra.mxu0 0.0
        %389 = vmatprep.subr.mxu0 0.0
        %390 = vmatpush1.msra.mxu0 0.0
        %391 = vmatprep.subr.mxu0 0.0
        %392 = vmatpush1.msra.mxu0 0.0
        %393 = vmatprep.subr.mxu0 0.0
        %394 = vmatpush1.msra.mxu0 0.0
        %395 = vmatprep.subr.mxu0 0.0
        %396 = vmatpush1.msra.mxu0 0.0
        %397 = vmatprep.subr.mxu0 0.0
        %398 = vmatpush1.msra.mxu0 0.0
        %399 = vmatprep.subr.mxu0 0.0
        %400 = vmatpush1.msra.mxu0 0.0
        %401 = vmatprep.subr.mxu0 0.0
        %402 = vmatpush1.msra.mxu0 0.0
        %403 = vmatprep.subr.mxu0 0.0
        %404 = vmatpush1.msra.mxu0 0.0
        %405 = vmatprep.subr.mxu0 0.0
        %406 = vmatpush1.msra.mxu0 0.0
        %407 = vmatprep.subr.mxu0 0.0
        %408 = vmatpush1.msra.mxu0 0.0
        %409 = vmatprep.subr.mxu0 0.0
        %410 = vmatpush1.msra.mxu0 0.0
        %411 = vmatprep.subr.mxu0 0.0
        %412 = vmatpush1.msra.mxu0 0.0
        %413 = vmatprep.subr.mxu0 0.0
        %414 = vmatpush1.msra.mxu0 0.0
        %415 = vmatprep.subr.mxu0 0.0
        %416 = vmatpush1.msra.mxu0 0.0
        %417 = vmatprep.subr.mxu0 0.0
        %418 = vmatpush1.msra.mxu0 0.0
        %419 = vmatprep.subr.mxu0 0.0
        %420 = vmatpush1.msra.mxu0 0.0
        %421 = vmatprep.subr.mxu0 0.0
        %422 = vmatpush1.msra.mxu0 0.0
        %423 = vmatprep.subr.mxu0 0.0
        %424 = vmatpush1.msra.mxu0 0.0
        %425 = vmatprep.subr.mxu0 0.0
        %426 = vmatpush1.msra.mxu0 0.0
        %427 = vmatprep.subr.mxu0 0.0
        %428 = vmatpush1.msra.mxu0 0.0
        %429 = vmatprep.subr.mxu0 0.0
        %430 = vmatpush1.msra.mxu0 0.0
        %431 = vmatprep.subr.mxu0 0.0
        %432 = vmatpush1.msra.mxu0 0.0
        %433 = vmatprep.subr.mxu0 0.0
        %434 = vmatpush1.msra.mxu0 0.0
        %435 = vmatprep.subr.mxu0 0.0
        %436 = vmatpush1.msra.mxu0 0.0
        %437 = vmatprep.subr.mxu0 0.0
        %438 = vmatpush1.msra.mxu0 0.0
        %439 = vmatprep.subr.mxu0 0.0
        %440 = vmatpush1.msra.mxu0 0.0
        %441 = vmatprep.mubr.f32.mxu0 0.0
        %442 = vmatmul.mubr.f32.gmra.mrb[0].mxu0 %v372
        %v443 = vpop.f32.mrb[0].mxu0
        %v444 = vadd.f32 %v343, %v443
        %v445 = vpop.f32.mrb[0].mxu0
        %v446 = vadd.f32 %v347, %v445
        %447 = vmatprep.mubr.f32.mxu0 0.0
        %448 = vmatmul.mubr.f32.gmra.mrb[0].mxu0 %v375
        %v449 = vpop.f32.mrb[0].mxu0
        %v450 = vadd.f32 %v343, %v449
        %v451 = vpop.f32.mrb[0].mxu0
        %v452 = vadd.f32 %v347, %v451
        %453 = vdwg.mxu0
        %454 = vmatprep.subr.mxu0 %v317
        %455 = vmatpush1.msra.mxu0 %v316
        %456 = vmatprep.subr.mxu0 %v323
        %457 = vmatpush1.msra.mxu0 %v322
        %458 = vmatprep.subr.mxu0 %v329
        %459 = vmatpush1.msra.mxu0 %v328
        %460 = vmatprep.subr.mxu0 %v335
        %461 = vmatpush1.msra.mxu0 %v334
        %462 = vmatprep.subr.mxu0 0.0
        %463 = vmatpush1.msra.mxu0 0.0
        %464 = vmatprep.subr.mxu0 0.0
        %465 = vmatpush1.msra.mxu0 0.0
        %466 = vmatprep.subr.mxu0 0.0
        %467 = vmatpush1.msra.mxu0 0.0
        %468 = vmatprep.subr.mxu0 0.0
        %469 = vmatpush1.msra.mxu0 0.0
        %470 = vmatprep.subr.mxu0 0.0
        %471 = vmatpush1.msra.mxu0 0.0
        %472 = vmatprep.subr.mxu0 0.0
        %473 = vmatpush1.msra.mxu0 0.0
        %474 = vmatprep.subr.mxu0 0.0
        %475 = vmatpush1.msra.mxu0 0.0
        %476 = vmatprep.subr.mxu0 0.0
        %477 = vmatpush1.msra.mxu0 0.0
        %478 = vmatprep.subr.mxu0 0.0
        %479 = vmatpush1.msra.mxu0 0.0
        %480 = vmatprep.subr.mxu0 0.0
        %481 = vmatpush1.msra.mxu0 0.0
        %482 = vmatprep.subr.mxu0 0.0
        %483 = vmatpush1.msra.mxu0 0.0
        %484 = vmatprep.subr.mxu0 0.0
        %485 = vmatpush1.msra.mxu0 0.0
        %486 = vmatprep.subr.mxu0 0.0
        %487 = vmatpush1.msra.mxu0 0.0
        %488 = vmatprep.subr.mxu0 0.0
        %489 = vmatpush1.msra.mxu0 0.0
        %490 = vmatprep.subr.mxu0 0.0
        %491 = vmatpush1.msra.mxu0 0.0
        %492 = vmatprep.subr.mxu0 0.0
        %493 = vmatpush1.msra.mxu0 0.0
        %494 = vmatprep.subr.mxu0 0.0
        %495 = vmatpush1.msra.mxu0 0.0
        %496 = vmatprep.subr.mxu0 0.0
        %497 = vmatpush1.msra.mxu0 0.0
        %498 = vmatprep.subr.mxu0 0.0
        %499 = vmatpush1.msra.mxu0 0.0
        %500 = vmatprep.subr.mxu0 0.0
        %501 = vmatpush1.msra.mxu0 0.0
        %502 = vmatprep.subr.mxu0 0.0
        %503 = vmatpush1.msra.mxu0 0.0
        %504 = vmatprep.subr.mxu0 0.0
        %505 = vmatpush1.msra.mxu0 0.0
        %506 = vmatprep.subr.mxu0 0.0
        %507 = vmatpush1.msra.mxu0 0.0
        %508 = vmatprep.subr.mxu0 0.0
        %509 = vmatpush1.msra.mxu0 0.0
        %510 = vmatprep.subr.mxu0 0.0
        %511 = vmatpush1.msra.mxu0 0.0
        %512 = vmatprep.subr.mxu0 0.0
        %513 = vmatpush1.msra.mxu0 0.0
        %514 = vmatprep.subr.mxu0 0.0
        %515 = vmatpush1.msra.mxu0 0.0
        %516 = vmatprep.subr.mxu0 0.0
        %517 = vmatpush1.msra.mxu0 0.0
        %518 = vmatprep.mubr.f32.mxu0 0.0
        %519 = vmatmul.mubr.f32.gmra.mrb[0].mxu0 %v372
        %v520 = vpop.f32.mrb[0].mxu0
        %v521 = vadd.f32 %v351, %v520
        %v522 = vpop.f32.mrb[0].mxu0
        %v523 = vadd.f32 %v355, %v522
        %524 = vmatprep.mubr.f32.mxu0 0.0
        %525 = vmatmul.mubr.f32.gmra.mrb[0].mxu0 %v375
        %v526 = vpop.f32.mrb[0].mxu0
        %v527 = vadd.f32 %v351, %v526
        %v528 = vpop.f32.mrb[0].mxu0
        %v529 = vadd.f32 %v355, %v528
        %530 = vdwg.mxu0
        %531 = vmatprep.subr.mxu0 %v319
        %532 = vmatpush1.msra.mxu0 %v318
        %533 = vmatprep.subr.mxu0 %v325
        %534 = vmatpush1.msra.mxu0 %v324
        %535 = vmatprep.subr.mxu0 %v331
        %536 = vmatpush1.msra.mxu0 %v330
        %537 = vmatprep.subr.mxu0 %v337
        %538 = vmatpush1.msra.mxu0 %v336
        %539 = vmatprep.subr.mxu0 0.0
        %540 = vmatpush1.msra.mxu0 0.0
        %541 = vmatprep.subr.mxu0 0.0
        %542 = vmatpush1.msra.mxu0 0.0
        %543 = vmatprep.subr.mxu0 0.0
        %544 = vmatpush1.msra.mxu0 0.0
        %545 = vmatprep.subr.mxu0 0.0
        %546 = vmatpush1.msra.mxu0 0.0
        %547 = vmatprep.subr.mxu0 0.0
        %548 = vmatpush1.msra.mxu0 0.0
        %549 = vmatprep.subr.mxu0 0.0
        %550 = vmatpush1.msra.mxu0 0.0
        %551 = vmatprep.subr.mxu0 0.0
        %552 = vmatpush1.msra.mxu0 0.0
        %553 = vmatprep.subr.mxu0 0.0
        %554 = vmatpush1.msra.mxu0 0.0
        %555 = vmatprep.subr.mxu0 0.0
        %556 = vmatpush1.msra.mxu0 0.0
        %557 = vmatprep.subr.mxu0 0.0
        %558 = vmatpush1.msra.mxu0 0.0
        %559 = vmatprep.subr.mxu0 0.0
        %560 = vmatpush1.msra.mxu0 0.0
        %561 = vmatprep.subr.mxu0 0.0
        %562 = vmatpush1.msra.mxu0 0.0
        %563 = vmatprep.subr.mxu0 0.0
        %564 = vmatpush1.msra.mxu0 0.0
        %565 = vmatprep.subr.mxu0 0.0
        %566 = vmatpush1.msra.mxu0 0.0
        %567 = vmatprep.subr.mxu0 0.0
        %568 = vmatpush1.msra.mxu0 0.0
        %569 = vmatprep.subr.mxu0 0.0
        %570 = vmatpush1.msra.mxu0 0.0
        %571 = vmatprep.subr.mxu0 0.0
        %572 = vmatpush1.msra.mxu0 0.0
        %573 = vmatprep.subr.mxu0 0.0
        %574 = vmatpush1.msra.mxu0 0.0
        %575 = vmatprep.subr.mxu0 0.0
        %576 = vmatpush1.msra.mxu0 0.0
        %577 = vmatprep.subr.mxu0 0.0
        %578 = vmatpush1.msra.mxu0 0.0
        %579 = vmatprep.subr.mxu0 0.0
        %580 = vmatpush1.msra.mxu0 0.0
        %581 = vmatprep.subr.mxu0 0.0
        %582 = vmatpush1.msra.mxu0 0.0
        %583 = vmatprep.subr.mxu0 0.0
        %584 = vmatpush1.msra.mxu0 0.0
        %585 = vmatprep.subr.mxu0 0.0
        %586 = vmatpush1.msra.mxu0 0.0
        %587 = vmatprep.subr.mxu0 0.0
        %588 = vmatpush1.msra.mxu0 0.0
        %589 = vmatprep.subr.mxu0 0.0
        %590 = vmatpush1.msra.mxu0 0.0
        %591 = vmatprep.subr.mxu0 0.0
        %592 = vmatpush1.msra.mxu0 0.0
        %593 = vmatprep.subr.mxu0 0.0
        %594 = vmatpush1.msra.mxu0 0.0
        %595 = vmatprep.mubr.f32.mxu0 0.0
        %596 = vmatmul.mubr.f32.gmra.mrb[0].mxu0 %v372
        %v597 = vpop.f32.mrb[0].mxu0
        %v598 = vadd.f32 %v359, %v597
        %v599 = vpop.f32.mrb[0].mxu0
        %v600 = vadd.f32 %v363, %v599
        %601 = vmatprep.mubr.f32.mxu0 0.0
        %602 = vmatmul.mubr.f32.gmra.mrb[0].mxu0 %v375
        %v603 = vpop.f32.mrb[0].mxu0
        %v604 = vadd.f32 %v359, %v603
        %v605 = vpop.f32.mrb[0].mxu0
        %v606 = vadd.f32 %v363, %v605
        %607 = vdwg.mxu0
        %vm608 = vcmp.gt.f32.partialorder %v444, 0.0
        %vm609 = vcmp.gt.f32.partialorder %v450, 0.0
        %v610 = vmul.f32 %v444, 0.01
        %v611 = vmul.f32 %v450, 0.01
        %v612 = vsel %vm608, %v444, %v610
        %v613 = vsel %vm609, %v450, %v611
        %614 = vst [vmem:[%s311] sm:$0xff] %v612
        %615 = vst [vmem:[%s311 + $0x30] sm:$0xff] %v613
        %v616 = vld [vmem:[%s272] sm:$0xff]
        %v617 = vld [vmem:[%s272 + $0x8] sm:$0xff]
        %vm618 = vcmask 130048
        %v620 = vsel %vm618, %v616, 0
        %v623 = vsel %vm618, %v617, 0
        %625 = vmatprep.subr.mxu0 0.0
        %626 = vmatpush1.msra.mxu0 %v446
        %627 = vmatprep.subr.mxu0 0.0
        %628 = vmatpush1.msra.mxu0 %v452
        %629 = vmatprep.subr.mxu0 0.0
        %630 = vmatpush1.msra.mxu0 0.0
        %631 = vmatprep.subr.mxu0 0.0
        %632 = vmatpush1.msra.mxu0 0.0
        %633 = vmatprep.subr.mxu0 0.0
        %634 = vmatpush1.msra.mxu0 0.0
        %635 = vmatprep.subr.mxu0 0.0
        %636 = vmatpush1.msra.mxu0 0.0
        %637 = vmatprep.subr.mxu0 0.0
        %638 = vmatpush1.msra.mxu0 0.0
        %639 = vmatprep.subr.mxu0 0.0
        %640 = vmatpush1.msra.mxu0 0.0
        %641 = vmatprep.subr.mxu0 0.0
        %642 = vmatpush1.msra.mxu0 0.0
        %643 = vmatprep.subr.mxu0 0.0
        %644 = vmatpush1.msra.mxu0 0.0
        %645 = vmatprep.subr.mxu0 0.0
        %646 = vmatpush1.msra.mxu0 0.0
        %647 = vmatprep.subr.mxu0 0.0
        %648 = vmatpush1.msra.mxu0 0.0
        %649 = vmatprep.subr.mxu0 0.0
        %650 = vmatpush1.msra.mxu0 0.0
        %651 = vmatprep.subr.mxu0 0.0
        %652 = vmatpush1.msra.mxu0 0.0
        %653 = vmatprep.subr.mxu0 0.0
        %654 = vmatpush1.msra.mxu0 0.0
        %655 = vmatprep.subr.mxu0 0.0
        %656 = vmatpush1.msra.mxu0 0.0
        %657 = vmatprep.subr.mxu0 0.0
        %658 = vmatpush1.msra.mxu0 0.0
        %659 = vmatprep.subr.mxu0 0.0
        %660 = vmatpush1.msra.mxu0 0.0
        %661 = vmatprep.subr.mxu0 0.0
        %662 = vmatpush1.msra.mxu0 0.0
        %663 = vmatprep.subr.mxu0 0.0
        %664 = vmatpush1.msra.mxu0 0.0
        %665 = vmatprep.subr.mxu0 0.0
        %666 = vmatpush1.msra.mxu0 0.0
        %667 = vmatprep.subr.mxu0 0.0
        %668 = vmatpush1.msra.mxu0 0.0
        %669 = vmatprep.subr.mxu0 0.0
        %670 = vmatpush1.msra.mxu0 0.0
        %671 = vmatprep.subr.mxu0 0.0
        %672 = vmatpush1.msra.mxu0 0.0
        %673 = vmatprep.subr.mxu0 0.0
        %674 = vmatpush1.msra.mxu0 0.0
        %675 = vmatprep.subr.mxu0 0.0
        %676 = vmatpush1.msra.mxu0 0.0
        %677 = vmatprep.subr.mxu0 0.0
        %678 = vmatpush1.msra.mxu0 0.0
        %679 = vmatprep.subr.mxu0 0.0
        %680 = vmatpush1.msra.mxu0 0.0
        %681 = vmatprep.subr.mxu0 0.0
        %682 = vmatpush1.msra.mxu0 0.0
        %683 = vmatprep.subr.mxu0 0.0
        %684 = vmatpush1.msra.mxu0 0.0
        %685 = vmatprep.subr.mxu0 0.0
        %686 = vmatpush1.msra.mxu0 0.0
        %687 = vmatprep.subr.mxu0 0.0
        %688 = vmatpush1.msra.mxu0 0.0
        %689 = vmatprep.mubr.f32.mxu0 0.0
        %690 = vmatmul.mubr.f32.gmra.mrb[0].mxu0 %v620
        %v691 = vpop.f32.mrb[0].mxu0
        %v692 = vadd.f32 0.0, %v691
        %v693 = vpop.f32.mrb[0].mxu0
        %694 = vmatprep.mubr.f32.mxu0 0.0
        %695 = vmatmul.mubr.f32.gmra.mrb[0].mxu0 %v623
        %v696 = vpop.f32.mrb[0].mxu0
        %v697 = vadd.f32 0.0, %v696
        %v698 = vpop.f32.mrb[0].mxu0
        %699 = vdwg.mxu0
        %vm700 = vcmp.gt.f32.partialorder %v692, 0.0
        %vm701 = vcmp.gt.f32.partialorder %v697, 0.0
        %v702 = vmul.f32 %v692, 0.01
        %v703 = vmul.f32 %v697, 0.01
        %v704 = vsel %vm700, %v692, %v702
        %v705 = vsel %vm701, %v697, %v703
        %706 = vst [vmem:[%s311 + $0x8] sm:$0xff] %v704
        %707 = vst [vmem:[%s311 + $0x38] sm:$0xff] %v705
        %s708 = scalar_lea.vmem %s272, 16 [#allocation5]
        %v709 = vld [vmem:[%s708] sm:$0xff]
        %v710 = vld [vmem:[%s708 + $0x8] sm:$0xff]
        %v712 = vsel %vm618, %v709, 0
        %v715 = vsel %vm618, %v710, 0
        %717 = vmatprep.subr.mxu0 0.0
        %718 = vmatpush1.msra.mxu0 %v521
        %719 = vmatprep.subr.mxu0 0.0
        %720 = vmatpush1.msra.mxu0 %v527
        %721 = vmatprep.subr.mxu0 0.0
        %722 = vmatpush1.msra.mxu0 0.0
        %723 = vmatprep.subr.mxu0 0.0
        %724 = vmatpush1.msra.mxu0 0.0
        %725 = vmatprep.subr.mxu0 0.0
        %726 = vmatpush1.msra.mxu0 0.0
        %727 = vmatprep.subr.mxu0 0.0
        %728 = vmatpush1.msra.mxu0 0.0
        %729 = vmatprep.subr.mxu0 0.0
        %730 = vmatpush1.msra.mxu0 0.0
        %731 = vmatprep.subr.mxu0 0.0
        %732 = vmatpush1.msra.mxu0 0.0
        %733 = vmatprep.subr.mxu0 0.0
        %734 = vmatpush1.msra.mxu0 0.0
        %735 = vmatprep.subr.mxu0 0.0
        %736 = vmatpush1.msra.mxu0 0.0
        %737 = vmatprep.subr.mxu0 0.0
        %738 = vmatpush1.msra.mxu0 0.0
        %739 = vmatprep.subr.mxu0 0.0
        %740 = vmatpush1.msra.mxu0 0.0
        %741 = vmatprep.subr.mxu0 0.0
        %742 = vmatpush1.msra.mxu0 0.0
        %743 = vmatprep.subr.mxu0 0.0
        %744 = vmatpush1.msra.mxu0 0.0
        %745 = vmatprep.subr.mxu0 0.0
        %746 = vmatpush1.msra.mxu0 0.0
        %747 = vmatprep.subr.mxu0 0.0
        %748 = vmatpush1.msra.mxu0 0.0
        %749 = vmatprep.subr.mxu0 0.0
        %750 = vmatpush1.msra.mxu0 0.0
        %751 = vmatprep.subr.mxu0 0.0
        %752 = vmatpush1.msra.mxu0 0.0
        %753 = vmatprep.subr.mxu0 0.0
        %754 = vmatpush1.msra.mxu0 0.0
        %755 = vmatprep.subr.mxu0 0.0
        %756 = vmatpush1.msra.mxu0 0.0
        %757 = vmatprep.subr.mxu0 0.0
        %758 = vmatpush1.msra.mxu0 0.0
        %759 = vmatprep.subr.mxu0 0.0
        %760 = vmatpush1.msra.mxu0 0.0
        %761 = vmatprep.subr.mxu0 0.0
        %762 = vmatpush1.msra.mxu0 0.0
        %763 = vmatprep.subr.mxu0 0.0
        %764 = vmatpush1.msra.mxu0 0.0
        %765 = vmatprep.subr.mxu0 0.0
        %766 = vmatpush1.msra.mxu0 0.0
        %767 = vmatprep.subr.mxu0 0.0
        %768 = vmatpush1.msra.mxu0 0.0
        %769 = vmatprep.subr.mxu0 0.0
        %770 = vmatpush1.msra.mxu0 0.0
        %771 = vmatprep.subr.mxu0 0.0
        %772 = vmatpush1.msra.mxu0 0.0
        %773 = vmatprep.subr.mxu0 0.0
        %774 = vmatpush1.msra.mxu0 0.0
        %775 = vmatprep.subr.mxu0 0.0
        %776 = vmatpush1.msra.mxu0 0.0
        %777 = vmatprep.subr.mxu0 0.0
        %778 = vmatpush1.msra.mxu0 0.0
        %779 = vmatprep.subr.mxu0 0.0
        %780 = vmatpush1.msra.mxu0 0.0
        %781 = vmatprep.mubr.f32.mxu0 0.0
        %782 = vmatmul.mubr.f32.gmra.mrb[0].mxu0 %v712
        %v783 = vpop.f32.mrb[0].mxu0
        %v784 = vadd.f32 0.0, %v783
        %v785 = vpop.f32.mrb[0].mxu0
        %786 = vmatprep.mubr.f32.mxu0 0.0
        %787 = vmatmul.mubr.f32.gmra.mrb[0].mxu0 %v715
        %v788 = vpop.f32.mrb[0].mxu0
        %v789 = vadd.f32 0.0, %v788
        %v790 = vpop.f32.mrb[0].mxu0
        %791 = vdwg.mxu0
        %vm792 = vcmp.gt.f32.partialorder %v784, 0.0
        %vm793 = vcmp.gt.f32.partialorder %v789, 0.0
        %v794 = vmul.f32 %v784, 0.01
        %v795 = vmul.f32 %v789, 0.01
        %v796 = vsel %vm792, %v784, %v794
        %v797 = vsel %vm793, %v789, %v795
        %798 = vst [vmem:[%s311 + $0x10] sm:$0xff] %v796
        %799 = vst [vmem:[%s311 + $0x40] sm:$0xff] %v797
        %vm800 = vcmp.gt.f32.partialorder %v523, 0.0
        %vm801 = vcmp.gt.f32.partialorder %v529, 0.0
        %v802 = vmul.f32 %v523, 0.01
        %v803 = vmul.f32 %v529, 0.01
        %v804 = vsel %vm800, %v523, %v802
        %v805 = vsel %vm801, %v529, %v803
        %806 = vst [vmem:[%s311 + $0x18] sm:$0xff] %v804
        %807 = vst [vmem:[%s311 + $0x48] sm:$0xff] %v805
        %v808 = vld [vmem:[#allocation7] sm:$0xff]
        %v809 = vld [vmem:[#allocation7 + $0x8] sm:$0xff]
        %v811 = vsel %vm618, %v808, 0
        %v814 = vsel %vm618, %v809, 0
        %816 = vmatprep.subr.mxu0 0.0
        %817 = vmatpush1.msra.mxu0 %v598
        %818 = vmatprep.subr.mxu0 0.0
        %819 = vmatpush1.msra.mxu0 %v604
        %820 = vmatprep.subr.mxu0 0.0
        %821 = vmatpush1.msra.mxu0 0.0
        %822 = vmatprep.subr.mxu0 0.0
        %823 = vmatpush1.msra.mxu0 0.0
        %824 = vmatprep.subr.mxu0 0.0
        %825 = vmatpush1.msra.mxu0 0.0
        %826 = vmatprep.subr.mxu0 0.0
        %827 = vmatpush1.msra.mxu0 0.0
        %828 = vmatprep.subr.mxu0 0.0
        %829 = vmatpush1.msra.mxu0 0.0
        %830 = vmatprep.subr.mxu0 0.0
        %831 = vmatpush1.msra.mxu0 0.0
        %832 = vmatprep.subr.mxu0 0.0
        %833 = vmatpush1.msra.mxu0 0.0
        %834 = vmatprep.subr.mxu0 0.0
        %835 = vmatpush1.msra.mxu0 0.0
        %836 = vmatprep.subr.mxu0 0.0
        %837 = vmatpush1.msra.mxu0 0.0
        %838 = vmatprep.subr.mxu0 0.0
        %839 = vmatpush1.msra.mxu0 0.0
        %840 = vmatprep.subr.mxu0 0.0
        %841 = vmatpush1.msra.mxu0 0.0
        %842 = vmatprep.subr.mxu0 0.0
        %843 = vmatpush1.msra.mxu0 0.0
        %844 = vmatprep.subr.mxu0 0.0
        %845 = vmatpush1.msra.mxu0 0.0
        %846 = vmatprep.subr.mxu0 0.0
        %847 = vmatpush1.msra.mxu0 0.0
        %848 = vmatprep.subr.mxu0 0.0
        %849 = vmatpush1.msra.mxu0 0.0
        %850 = vmatprep.subr.mxu0 0.0
        %851 = vmatpush1.msra.mxu0 0.0
        %852 = vmatprep.subr.mxu0 0.0
        %853 = vmatpush1.msra.mxu0 0.0
        %854 = vmatprep.subr.mxu0 0.0
        %855 = vmatpush1.msra.mxu0 0.0
        %856 = vmatprep.subr.mxu0 0.0
        %857 = vmatpush1.msra.mxu0 0.0
        %858 = vmatprep.subr.mxu0 0.0
        %859 = vmatpush1.msra.mxu0 0.0
        %860 = vmatprep.subr.mxu0 0.0
        %861 = vmatpush1.msra.mxu0 0.0
        %862 = vmatprep.subr.mxu0 0.0
        %863 = vmatpush1.msra.mxu0 0.0
        %864 = vmatprep.subr.mxu0 0.0
        %865 = vmatpush1.msra.mxu0 0.0
        %866 = vmatprep.subr.mxu0 0.0
        %867 = vmatpush1.msra.mxu0 0.0
        %868 = vmatprep.subr.mxu0 0.0
        %869 = vmatpush1.msra.mxu0 0.0
        %870 = vmatprep.subr.mxu0 0.0
        %871 = vmatpush1.msra.mxu0 0.0
        %872 = vmatprep.subr.mxu0 0.0
        %873 = vmatpush1.msra.mxu0 0.0
        %874 = vmatprep.subr.mxu0 0.0
        %875 = vmatpush1.msra.mxu0 0.0
        %876 = vmatprep.subr.mxu0 0.0
        %877 = vmatpush1.msra.mxu0 0.0
        %878 = vmatprep.subr.mxu0 0.0
        %879 = vmatpush1.msra.mxu0 0.0
        %880 = vmatprep.mubr.f32.mxu0 0.0
        %881 = vmatmul.mubr.f32.gmra.mrb[0].mxu0 %v811
        %v882 = vpop.f32.mrb[0].mxu0
        %v883 = vadd.f32 0.0, %v882
        %v884 = vpop.f32.mrb[0].mxu0
        %885 = vmatprep.mubr.f32.mxu0 0.0
        %886 = vmatmul.mubr.f32.gmra.mrb[0].mxu0 %v814
        %v887 = vpop.f32.mrb[0].mxu0
        %v888 = vadd.f32 0.0, %v887
        %v889 = vpop.f32.mrb[0].mxu0
        %890 = vdwg.mxu0
        %vm891 = vcmp.gt.f32.partialorder %v883, 0.0
        %vm892 = vcmp.gt.f32.partialorder %v888, 0.0
        %v893 = vmul.f32 %v883, 0.01
        %v894 = vmul.f32 %v888, 0.01
        %v895 = vsel %vm891, %v883, %v893
        %v896 = vsel %vm892, %v888, %v894
        %897 = vst [vmem:[%s311 + $0x20] sm:$0xff] %v895
        %898 = vst [vmem:[%s311 + $0x50] sm:$0xff] %v896
        %s899 = scalar_lea.vmem [#allocation7], 16
        %v900 = vld [vmem:[%s899] sm:$0xff]
        %v901 = vld [vmem:[%s899 + $0x8] sm:$0xff]
        %v903 = vsel %vm618, %v900, 0
        %v906 = vsel %vm618, %v901, 0
        %908 = vmatprep.subr.mxu0 0.0
        %909 = vmatpush1.msra.mxu0 %v600
        %910 = vmatprep.subr.mxu0 0.0
        %911 = vmatpush1.msra.mxu0 %v606
        %912 = vmatprep.subr.mxu0 0.0
        %913 = vmatpush1.msra.mxu0 0.0
        %914 = vmatprep.subr.mxu0 0.0
        %915 = vmatpush1.msra.mxu0 0.0
        %916 = vmatprep.subr.mxu0 0.0
        %917 = vmatpush1.msra.mxu0 0.0
        %918 = vmatprep.subr.mxu0 0.0
        %919 = vmatpush1.msra.mxu0 0.0
        %920 = vmatprep.subr.mxu0 0.0
        %921 = vmatpush1.msra.mxu0 0.0
        %922 = vmatprep.subr.mxu0 0.0
        %923 = vmatpush1.msra.mxu0 0.0
        %924 = vmatprep.subr.mxu0 0.0
        %925 = vmatpush1.msra.mxu0 0.0
        %926 = vmatprep.subr.mxu0 0.0
        %927 = vmatpush1.msra.mxu0 0.0
        %928 = vmatprep.subr.mxu0 0.0
        %929 = vmatpush1.msra.mxu0 0.0
        %930 = vmatprep.subr.mxu0 0.0
        %931 = vmatpush1.msra.mxu0 0.0
        %932 = vmatprep.subr.mxu0 0.0
        %933 = vmatpush1.msra.mxu0 0.0
        %934 = vmatprep.subr.mxu0 0.0
        %935 = vmatpush1.msra.mxu0 0.0
        %936 = vmatprep.subr.mxu0 0.0
        %937 = vmatpush1.msra.mxu0 0.0
        %938 = vmatprep.subr.mxu0 0.0
        %939 = vmatpush1.msra.mxu0 0.0
        %940 = vmatprep.subr.mxu0 0.0
        %941 = vmatpush1.msra.mxu0 0.0
        %942 = vmatprep.subr.mxu0 0.0
        %943 = vmatpush1.msra.mxu0 0.0
        %944 = vmatprep.subr.mxu0 0.0
        %945 = vmatpush1.msra.mxu0 0.0
        %946 = vmatprep.subr.mxu0 0.0
        %947 = vmatpush1.msra.mxu0 0.0
        %948 = vmatprep.subr.mxu0 0.0
        %949 = vmatpush1.msra.mxu0 0.0
        %950 = vmatprep.subr.mxu0 0.0
        %951 = vmatpush1.msra.mxu0 0.0
        %952 = vmatprep.subr.mxu0 0.0
        %953 = vmatpush1.msra.mxu0 0.0
        %954 = vmatprep.subr.mxu0 0.0
        %955 = vmatpush1.msra.mxu0 0.0
        %956 = vmatprep.subr.mxu0 0.0
        %957 = vmatpush1.msra.mxu0 0.0
        %958 = vmatprep.subr.mxu0 0.0
        %959 = vmatpush1.msra.mxu0 0.0
        %960 = vmatprep.subr.mxu0 0.0
        %961 = vmatpush1.msra.mxu0 0.0
        %962 = vmatprep.subr.mxu0 0.0
        %963 = vmatpush1.msra.mxu0 0.0
        %964 = vmatprep.subr.mxu0 0.0
        %965 = vmatpush1.msra.mxu0 0.0
        %966 = vmatprep.subr.mxu0 0.0
        %967 = vmatpush1.msra.mxu0 0.0
        %968 = vmatprep.subr.mxu0 0.0
        %969 = vmatpush1.msra.mxu0 0.0
        %970 = vmatprep.subr.mxu0 0.0
        %971 = vmatpush1.msra.mxu0 0.0
        %972 = vmatprep.mubr.f32.mxu0 0.0
        %973 = vmatmul.mubr.f32.gmra.mrb[0].mxu0 %v903
        %v974 = vpop.f32.mrb[0].mxu0
        %v975 = vadd.f32 0.0, %v974
        %v976 = vpop.f32.mrb[0].mxu0
        %977 = vmatprep.mubr.f32.mxu0 0.0
        %978 = vmatmul.mubr.f32.gmra.mrb[0].mxu0 %v906
        %v979 = vpop.f32.mrb[0].mxu0
        %v980 = vadd.f32 0.0, %v979
        %v981 = vpop.f32.mrb[0].mxu0
        %982 = vdwg.mxu0
        %vm983 = vcmp.gt.f32.partialorder %v975, 0.0
        %vm984 = vcmp.gt.f32.partialorder %v980, 0.0
        %v985 = vmul.f32 %v975, 0.01
        %v986 = vmul.f32 %v980, 0.01
        %v987 = vsel %vm983, %v975, %v985
        %v988 = vsel %vm984, %v980, %v986
        %989 = vst [vmem:[%s311 + $0x28] sm:$0xff] %v987
        %990 = vst [vmem:[%s311 + $0x58] sm:$0xff] %v988
        %s991 = sand.u32 %s149, 1
        %s992 = scalar_lea.sflag [#allocation4], %s991
        %s993 = sand.u32 %s149, 1
        %s994 = smul.addr %s993, 96
        %s995 = scalar_lea.vmem [#allocation10], %s994
        // Predicated region
        $region57: #{tpu_custom_call.1} parent=39 // pred_check
          %p996 = pneg %p159
        $region58: #{tpu_custom_call.1} parent=39 // pred_check_branch
          %998 = sbr.rel (%p996) target = $region60
        $region59: #{tpu_custom_call.1} parent=39 // pred_region
          %s1000 = ssub.s32 1536, 1536
          %1001 = vsyncadd %s992, %s1000
          %s1002 = smul.addr %s26, 12
          %s1003 = smul.addr %s1002, 128
          %s1004 = scalar_lea.hbm %s5, %s1003
          %s1005 = sshll.u32 %s995, 4
          %s1006 = int_to_ptr.vmem [resolvable:$true] %s1005
          %1011 = dma.vmem_to_hbm [thread:$0]  %s1006, 1536, %s1004, %s992, 768, 768, 48
        $region60: #{tpu_custom_call.1} parent=39 // pred_fallthru
          _
      $region40: #{tpu_custom_call.1} parent=5 // pred_fallthru
        _
      %p1012 = scmp.le.s32.totalorder 2, %s21
      // Predicated region
      $region61: #{tpu_custom_call.1} parent=5 // pred_check
        %p1013 = pneg %p1012
      $region62: #{tpu_custom_call.1} parent=5 // pred_check_branch
        %1015 = sbr.rel (%p1013) target = $region64
      $region63: #{tpu_custom_call.1} parent=5 // pred_region
        %s1016 = ssub.s32 %s21, 2
        // Predicated region
        $region65: #{tpu_custom_call.1} parent=63 // pred_check
          %p1017 = pneg %p165
        $region66: #{tpu_custom_call.1} parent=63 // pred_check_branch
          %1019 = sbr.rel (%p1017) target = $region68
        $region67: #{tpu_custom_call.1} parent=63 // pred_region
          %s1020 = sand.u32 %s150, 1
          %s1021 = scalar_lea.sflag [#allocation4], %s1020
          %s1022 = sand.u32 %s150, 1
          %s1023 = smul.addr %s1022, 96
          %s1024 = scalar_lea.vmem [#allocation10], %s1023
          %1025 = dma.done %s1021, 1536
        $region68: #{tpu_custom_call.1} parent=63 // pred_fallthru
          _
      $region64: #{tpu_custom_call.1} parent=5 // pred_fallthru
        _
    $region6: #{tpu_custom_call.1} parent=1 // loop_footer
      %s25 = sadd.s32 1, %s21
    $region7: #{tpu_custom_call.1} parent=1 // loop_footer_branch
      %20 = sbr.rel target = $region3
    $region8: #{tpu_custom_call.1} parent=1 // loop_exit
      _
    %1026 = vsyncpa [#allocation3], 1
    %s1027 = scalar_lea.sflag [#allocation3], 1
    %1028 = vsyncpa %s1027, 1
    %1029 = vsyncpa [#allocation6], 1
    %s1030 = scalar_lea.sflag [#allocation6], 1
    %1031 = vsyncpa %s1030, 1
    %1032 = vsyncpa [#allocation9], 1
    %1033 = vsyncpa [#allocation4], 1
    %s1034 = scalar_lea.sflag [#allocation4], 1
    %1035 = vsyncpa %s1034, 1

</llo_original>
